<compile_context>
chip_gen: v7x
topology: tpu7x:2x2x1
jax: 0.10.0
libtpu: 0.0.40
codegen_flags: <defaults>
</compile_context>

<pallas_src>
import math
from functools import partial

import jax
import jax.numpy as jnp
from jax import lax
from jax.experimental import pallas as pl
from jax.experimental.pallas import tpu as pltpu

# -- physical constants from the module's __init__ --------------------------
LAMBDA_A = 0.1
LAMBDA_P = 0.2
_D0 = 1.0 - LAMBDA_A                                   # 0.9
_D1 = math.sqrt((1.0 - LAMBDA_A) * (1.0 - LAMBDA_P))   # sqrt(0.72)
_HD0 = 0.5 * _D0     # absorbs the 1/2 of the preceding RX(+-pi/2) stage
_HD1 = 0.5 * _D1     # folded host-side into the following RZ cos/sin coeffs

LANES = 128
CHUNK_ROWS = 8                     # sublane rows per inner loop step (1 vreg/plane)
DEFAULT_MAX_TILE_ROWS = 512        # ~2 MiB per block -> near HBM roofline


def _cdiv(a, b):
    return -(-a // b)


def _round_up(a, b):
    return _cdiv(a, b) * b


# ---------------------------------------------------------------------------
# Elementwise stages on the 8 component planes
#   (re00, im00, re01, im01, re10, im10, re11, im11)
# ---------------------------------------------------------------------------
def _apply_rz(c, s, c8):
    """rho01 *= (c - i s), rho10 *= (c + i s); diagonal untouched.
    (c, s) may carry a folded 0.5*d1 decoherence/rx scale."""
    r00r, r00i, r01r, r01i, r10r, r10i, r11r, r11i = c8
    return (r00r, r00i,
            c * r01r + s * r01i, c * r01i - s * r01r,
            c * r10r - s * r10i, c * r10i + s * r10r,
            r11r, r11i)


def _apply_rx_half_pi_2x(c8, positive):
    """2 * (RX(+-pi/2) rho RX(+-pi/2)^dag); pure adds, the 1/2 is folded into
    the next stage's coefficients."""
    r00r, r00i, r01r, r01i, r10r, r10i, r11r, r11i = c8
    sdr = r00r + r11r
    sdi = r00i + r11i
    ddr = r00r - r11r
    ddi = r00i - r11i
    sor = r01r + r10r
    soi = r01i + r10i
    dor = r01r - r10r
    doi = r01i - r10i
    if positive:
        return (sdr - doi, sdi + dor,
                sor - ddi, soi + ddr,
                sor + ddi, soi - ddr,
                sdr + doi, sdi - dor)
    return (sdr + doi, sdi - dor,
            sor + ddi, soi - ddr,
            sor - ddi, soi + ddr,
            sdr - doi, sdi + dor)


def _decoh_diag_half(c8):
    """Diagonal part of the decoherence map applied to a 2x-scaled input:
    0.5*d0*x (+ lambda_A on re00).  Off-diagonal d1 (and the 0.5) is folded
    into the next RZ coefficients."""
    r00r, r00i, r01r, r01i, r10r, r10i, r11r, r11i = c8
    return (_HD0 * r00r + LAMBDA_A, _HD0 * r00i,
            r01r, r01i, r10r, r10i,
            _HD0 * r11r, _HD0 * r11i)


# ---------------------------------------------------------------------------
# Kernel
# ---------------------------------------------------------------------------
def gate_kernel(cs_ref, rho_ref, out_ref):
    """cs_ref : SMEM (6*n_gates,) f32, per gate:
         [cos p2, sin p2, 0.5*d1*cos p1, 0.5*d1*sin p1, 0.5*d1*cos p0, 0.5*d1*sin p0]
    rho_ref / out_ref : VMEM (8, tile_rows, 128) f32 component planes."""
    n_gates = cs_ref.shape[0] // 6
    tile_rows = rho_ref.shape[1]
    n_chunks = tile_rows // CHUNK_ROWS

    # Hoist the SMEM scalar reads out of the loop.
    coeffs = [cs_ref[i] for i in range(6 * n_gates)]

    def chunk_body(ci, carry):
        r0 = pl.multiple_of(ci * CHUNK_ROWS, CHUNK_ROWS)
        c8 = tuple(rho_ref[k, pl.ds(r0, CHUNK_ROWS), :] for k in range(8))
        for g in range(n_gates):
            c2, s2, a1, b1, a0, b0 = coeffs[6 * g:6 * g + 6]
            # forward: rz(p2) -> rx(+pi/2) -> decoh -> rz(p1) -> rx(-pi/2)
            #          -> decoh -> rz(p0)     (d1 and 0.5 folded into a*/b*)
            c8 = _apply_rz(c2, s2, c8)
            c8 = _apply_rx_half_pi_2x(c8, True)
            c8 = _decoh_diag_half(c8)
            c8 = _apply_rz(a1, b1, c8)
            c8 = _apply_rx_half_pi_2x(c8, False)
            c8 = _decoh_diag_half(c8)
            c8 = _apply_rz(a0, b0, c8)
        for k in range(8):
            out_ref[k, pl.ds(r0, CHUNK_ROWS), :] = c8[k]
        return carry

    lax.fori_loop(0, n_chunks, chunk_body, 0)


# ---------------------------------------------------------------------------
# Host-side packing / coefficients / pallas_call wrapper
# ---------------------------------------------------------------------------
def _choose_tiling(rows_needed, max_tile_rows):
    """Pick tile_rows <= max_tile_rows (multiple of 8) minimizing padding."""
    num_tiles = _cdiv(rows_needed, max_tile_rows)
    tile_rows = _round_up(_cdiv(rows_needed, num_tiles), CHUNK_ROWS)
    return tile_rows, num_tiles


def pack_density_matrices(rho, max_tile_rows=DEFAULT_MAX_TILE_ROWS):
    """(B, 2, 2) complex64 -> ((8, R, 128) f32 planes, B, tile_rows)."""
    B = rho.shape[0]
    rows_needed = max(_cdiv(B, LANES), 1)
    tile_rows, num_tiles = _choose_tiling(rows_needed, max_tile_rows)
    R = tile_rows * num_tiles
    Bp = R * LANES
    re = jnp.real(rho).astype(jnp.float32)
    im = jnp.imag(rho).astype(jnp.float32)
    comps = jnp.stack(
        [re[:, 0, 0], im[:, 0, 0],
         re[:, 0, 1], im[:, 0, 1],
         re[:, 1, 0], im[:, 1, 0],
         re[:, 1, 1], im[:, 1, 1]], axis=0)          # (8, B)
    comps = jnp.pad(comps, ((0, 0), (0, Bp - B)))
    # NOTE: padded (zero) entries pick up the lambda_A offset in the re00 plane
    # after the gate; they are sliced off by unpack and never reused.
    return comps.reshape(8, R, LANES), B, tile_rows


def unpack_density_matrices(packed, B):
    flat = packed.reshape(8, -1)[:, :B]              # (8, B)
    cplx = (flat[0::2] + 1j * flat[1::2]).astype(jnp.complex64)   # (4, B)
    return jnp.moveaxis(cplx, 0, 1).reshape(B, 2, 2)


def gate_coefficients(params):
    """params: (3,) for one gate or (N, 3) for a gate sequence -> (6*N,) f32."""
    p = jnp.asarray(params, jnp.float32).reshape(-1, 3)
    c = jnp.cos(p)
    s = jnp.sin(p)
    cs = jnp.stack([c[:, 2], s[:, 2],
                    _HD1 * c[:, 1], _HD1 * s[:, 1],
                    _HD1 * c[:, 0], _HD1 * s[:, 0]], axis=1)      # (N, 6)
    return cs.reshape(-1)


def apply_gates_packed(packed, cs, tile_rows):
    """Run the (sequence of) gate(s) on already-packed planes; stays packed."""
    R = packed.shape[1]
    assert R % tile_rows == 0 and tile_rows % CHUNK_ROWS == 0
    blk = (8, tile_rows, LANES)
    return pl.pallas_call(
        gate_kernel,
        out_shape=jax.ShapeDtypeStruct(packed.shape, jnp.float32),
        grid_spec=pltpu.PrefetchScalarGridSpec(
            num_scalar_prefetch=1,
            grid=(R // tile_rows,),
            in_specs=[pl.BlockSpec(blk, lambda i, cs_ref: (0, i, 0))],
            out_specs=pl.BlockSpec(blk, lambda i, cs_ref: (0, i, 0)),
        ),
        compiler_params=pltpu.CompilerParams(
            dimension_semantics=("parallel",)),
    )(cs, packed)


@partial(jax.jit, static_argnames=("max_tile_rows",))
def general_one_qubit_gate_batched(rho, params,
                                   max_tile_rows=DEFAULT_MAX_TILE_ROWS):
    """rho: (B, 2, 2) complex64, params: (3,) or (N, 3) -> (B, 2, 2) complex64.
    For circuits, prefer pack_density_matrices / apply_gates_packed /
    unpack_density_matrices directly to amortize the layout transposes."""
    packed, B, tile_rows = pack_density_matrices(rho, max_tile_rows)
    packed = apply_gates_packed(packed, gate_coefficients(params), tile_rows)
    return unpack_density_matrices(packed, B)


def general_one_qubit_gate(rho, params):
    """Single (2, 2) density matrix, matching the torch module's forward()."""
    return general_one_qubit_gate_batched(rho[None], params)[0]


# ---------------- pure-JAX reference (mirrors the torch module) -------------
def _reference(rho, params):
    rho = rho.astype(jnp.complex64)
    eye = jnp.eye(2, dtype=jnp.complex64)
    xop = jnp.array([[0, 1], [1, 0]], jnp.complex64)
    zop = jnp.array([[1, 0], [0, -1]], jnp.complex64)
    decoh = jnp.diag(jnp.array([_D0, _D1, _D1, _D0], jnp.complex64))
    doff = jnp.array([LAMBDA_A, 0, 0, 0], jnp.complex64)

    def apply_rx(r, angle):
        rx = jnp.cos(angle / 2) * eye - 1j * jnp.sin(angle / 2) * xop
        return rx @ r @ rx.T.conj()

    def apply_rz(r, angle):
        rz = jnp.cos(angle / 2) * eye - 1j * jnp.sin(angle / 2) * zop
        return rz @ r @ rz.T.conj()

    def apply_decoh(r):
        return (decoh @ r.reshape(4) + doff).reshape(2, 2)

    r = apply_rz(rho, params[2])
    r = apply_rx(r, jnp.float32(math.pi / 2))
    r = apply_decoh(r)
    r = apply_rz(r, params[1])
    r = apply_rx(r, jnp.float32(-math.pi / 2))
    r = apply_decoh(r)
    r = apply_rz(r, params[0])
    return r


if __name__ == "__main__":
    key = jax.random.PRNGKey(0)
    k1, k2, k3, k4 = jax.random.split(key, 4)

    params = jax.random.normal(k1, (3,), dtype=jnp.float32)

    def random_density_matrices(k, b):
        ka, kb = jax.random.split(k)
        v = (jax.random.normal(ka, (b, 2, 2), dtype=jnp.float32)
             + 1j * jax.random.normal(kb, (b, 2, 2), dtype=jnp.float32)
             ).astype(jnp.complex64)
        r = jnp.einsum('bij,bkj->bik', v, v.conj())
        tr = jnp.trace(r, axis1=1, axis2=2)[:, None, None]
        return (r / tr).astype(jnp.complex64)

    # 1) small batch, single gate
    rho = random_density_matrices(k2, 2)
    out = jax.block_until_ready(general_one_qubit_gate_batched(rho, params))
    ref = jax.vmap(lambda r: _reference(r, params))(rho)
    assert jnp.allclose(out, ref, atol=1e-5, rtol=1e-4), (out, ref)

    # single-matrix path (module forward semantics)
    out1 = jax.block_until_ready(general_one_qubit_gate(rho[0], params))
    ref1 = _reference(rho[0], params)
    assert jnp.allclose(out1, ref1, atol=1e-5, rtol=1e-4), (out1, ref1)

    # 2) larger batch exercising grid > 1 and the in-kernel chunk loop
    rho_big = random_density_matrices(k3, 2048)
    out_big = jax.block_until_ready(
        general_one_qubit_gate_batched(rho_big, params, max_tile_rows=8))
    ref_big = jax.vmap(lambda r: _reference(r, params))(rho_big)
    assert jnp.allclose(out_big, ref_big, atol=1e-5, rtol=1e-4)

    # 3) 3-gate circuit: pack once, run all gates in ONE kernel, unpack once
    params_seq = jax.random.normal(k4, (3, 3), dtype=jnp.float32)

    @jax.jit
    def circuit(r, pseq):
        packed, B, tile_rows = pack_density_matrices(r)
        packed = apply_gates_packed(packed, gate_coefficients(pseq), tile_rows)
        return unpack_density_matrices(packed, B)

    out_seq = jax.block_until_ready(circuit(rho, params_seq))
    ref_seq = rho
    for g in range(3):
        ref_seq = jax.vmap(lambda r: _reference(r, params_seq[g]))(ref_seq)
    assert jnp.allclose(out_seq, ref_seq, atol=1e-5, rtol=1e-4)

    print("KERNEL_OK")
</pallas_src>

<mosaic_0001>
module attributes {stable_mosaic.version = 11 : i64} {
  func.func @gate_kernel(%arg0: i32, %arg1: memref<6xf32, #tpu.memory_space<smem>>, %arg2: memref<8x8x128xf32, #tpu.memory_space<vmem>>, %arg3: memref<8x8x128xf32, #tpu.memory_space<vmem>>) attributes {dimension_semantics = [#tpu.dimension_semantics<parallel>], iteration_bounds = array<i64: 1>, scalar_prefetch = 1 : i64, scratch_operands = 0 : i64, tpu.core_type = #tpu.core_type<tc>, window_params = [{transform_indices = @transform_0, window_bounds = array<i64: 8, 8, 128>}, {transform_indices = @transform_1, window_bounds = array<i64: 8, 8, 128>}]} {
    %c0 = arith.constant 0 : index
    %0 = memref.load %arg1[%c0] : memref<6xf32, #tpu.memory_space<smem>>
    %c1 = arith.constant 1 : index
    %1 = memref.load %arg1[%c1] : memref<6xf32, #tpu.memory_space<smem>>
    %c2 = arith.constant 2 : index
    %2 = memref.load %arg1[%c2] : memref<6xf32, #tpu.memory_space<smem>>
    %c3 = arith.constant 3 : index
    %3 = memref.load %arg1[%c3] : memref<6xf32, #tpu.memory_space<smem>>
    %c4 = arith.constant 4 : index
    %4 = memref.load %arg1[%c4] : memref<6xf32, #tpu.memory_space<smem>>
    %c5 = arith.constant 5 : index
    %5 = memref.load %arg1[%c5] : memref<6xf32, #tpu.memory_space<smem>>
    %c0_i32 = arith.constant 0 : i32
    %c8_i32 = arith.constant 8 : i32
    %6 = arith.muli %c0_i32, %c8_i32 : i32
    %7 = tpu.assume_multiple %6, 8 : i32
    %c0_0 = arith.constant 0 : index
    %8 = arith.index_cast %7 : i32 to index
    %c0_1 = arith.constant 0 : index
    %9 = vector.load %arg2[%c0_0, %8, %c0_1] : memref<8x8x128xf32, #tpu.memory_space<vmem>>, vector<1x8x128xf32>
    %10 = vector.shape_cast %9 : vector<1x8x128xf32> to vector<8x128xf32>
    %c1_2 = arith.constant 1 : index
    %11 = arith.index_cast %7 : i32 to index
    %c0_3 = arith.constant 0 : index
    %12 = vector.load %arg2[%c1_2, %11, %c0_3] : memref<8x8x128xf32, #tpu.memory_space<vmem>>, vector<1x8x128xf32>
    %13 = vector.shape_cast %12 : vector<1x8x128xf32> to vector<8x128xf32>
    %c2_4 = arith.constant 2 : index
    %14 = arith.index_cast %7 : i32 to index
    %c0_5 = arith.constant 0 : index
    %15 = vector.load %arg2[%c2_4, %14, %c0_5] : memref<8x8x128xf32, #tpu.memory_space<vmem>>, vector<1x8x128xf32>
    %16 = vector.shape_cast %15 : vector<1x8x128xf32> to vector<8x128xf32>
    %c3_6 = arith.constant 3 : index
    %17 = arith.index_cast %7 : i32 to index
    %c0_7 = arith.constant 0 : index
    %18 = vector.load %arg2[%c3_6, %17, %c0_7] : memref<8x8x128xf32, #tpu.memory_space<vmem>>, vector<1x8x128xf32>
    %19 = vector.shape_cast %18 : vector<1x8x128xf32> to vector<8x128xf32>
    %c4_8 = arith.constant 4 : index
    %20 = arith.index_cast %7 : i32 to index
    %c0_9 = arith.constant 0 : index
    %21 = vector.load %arg2[%c4_8, %20, %c0_9] : memref<8x8x128xf32, #tpu.memory_space<vmem>>, vector<1x8x128xf32>
    %22 = vector.shape_cast %21 : vector<1x8x128xf32> to vector<8x128xf32>
    %c5_10 = arith.constant 5 : index
    %23 = arith.index_cast %7 : i32 to index
    %c0_11 = arith.constant 0 : index
    %24 = vector.load %arg2[%c5_10, %23, %c0_11] : memref<8x8x128xf32, #tpu.memory_space<vmem>>, vector<1x8x128xf32>
    %25 = vector.shape_cast %24 : vector<1x8x128xf32> to vector<8x128xf32>
    %c6 = arith.constant 6 : index
    %26 = arith.index_cast %7 : i32 to index
    %c0_12 = arith.constant 0 : index
    %27 = vector.load %arg2[%c6, %26, %c0_12] : memref<8x8x128xf32, #tpu.memory_space<vmem>>, vector<1x8x128xf32>
    %28 = vector.shape_cast %27 : vector<1x8x128xf32> to vector<8x128xf32>
    %c7 = arith.constant 7 : index
    %29 = arith.index_cast %7 : i32 to index
    %c0_13 = arith.constant 0 : index
    %30 = vector.load %arg2[%c7, %29, %c0_13] : memref<8x8x128xf32, #tpu.memory_space<vmem>>, vector<1x8x128xf32>
    %31 = vector.shape_cast %30 : vector<1x8x128xf32> to vector<8x128xf32>
    %32 = vector.broadcast %0 : f32 to vector<8x128xf32>
    %33 = arith.mulf %32, %16 : vector<8x128xf32>
    %34 = vector.broadcast %1 : f32 to vector<8x128xf32>
    %35 = arith.mulf %34, %19 : vector<8x128xf32>
    %36 = arith.addf %33, %35 : vector<8x128xf32>
    %37 = vector.broadcast %0 : f32 to vector<8x128xf32>
    %38 = arith.mulf %37, %19 : vector<8x128xf32>
    %39 = vector.broadcast %1 : f32 to vector<8x128xf32>
    %40 = arith.mulf %39, %16 : vector<8x128xf32>
    %41 = arith.subf %38, %40 : vector<8x128xf32>
    %42 = vector.broadcast %0 : f32 to vector<8x128xf32>
    %43 = arith.mulf %42, %22 : vector<8x128xf32>
    %44 = vector.broadcast %1 : f32 to vector<8x128xf32>
    %45 = arith.mulf %44, %25 : vector<8x128xf32>
    %46 = arith.subf %43, %45 : vector<8x128xf32>
    %47 = vector.broadcast %0 : f32 to vector<8x128xf32>
    %48 = arith.mulf %47, %25 : vector<8x128xf32>
    %49 = vector.broadcast %1 : f32 to vector<8x128xf32>
    %50 = arith.mulf %49, %22 : vector<8x128xf32>
    %51 = arith.addf %48, %50 : vector<8x128xf32>
    %52 = arith.addf %10, %28 : vector<8x128xf32>
    %53 = arith.addf %13, %31 : vector<8x128xf32>
    %54 = arith.subf %10, %28 : vector<8x128xf32>
    %55 = arith.subf %13, %31 : vector<8x128xf32>
    %56 = arith.addf %36, %46 : vector<8x128xf32>
    %57 = arith.addf %41, %51 : vector<8x128xf32>
    %58 = arith.subf %36, %46 : vector<8x128xf32>
    %59 = arith.subf %41, %51 : vector<8x128xf32>
    %60 = arith.subf %52, %59 : vector<8x128xf32>
    %61 = arith.addf %53, %58 : vector<8x128xf32>
    %62 = arith.subf %56, %55 : vector<8x128xf32>
    %63 = arith.addf %57, %54 : vector<8x128xf32>
    %64 = arith.addf %56, %55 : vector<8x128xf32>
    %65 = arith.subf %57, %54 : vector<8x128xf32>
    %66 = arith.addf %52, %59 : vector<8x128xf32>
    %67 = arith.subf %53, %58 : vector<8x128xf32>
    %cst = arith.constant 4.500000e-01 : f32
    %68 = vector.broadcast %cst : f32 to vector<8x128xf32>
    %69 = arith.mulf %68, %60 : vector<8x128xf32>
    %cst_14 = arith.constant 1.000000e-01 : f32
    %70 = vector.broadcast %cst_14 : f32 to vector<8x128xf32>
    %71 = arith.addf %69, %70 : vector<8x128xf32>
    %cst_15 = arith.constant 4.500000e-01 : f32
    %72 = vector.broadcast %cst_15 : f32 to vector<8x128xf32>
    %73 = arith.mulf %72, %61 : vector<8x128xf32>
    %cst_16 = arith.constant 4.500000e-01 : f32
    %74 = vector.broadcast %cst_16 : f32 to vector<8x128xf32>
    %75 = arith.mulf %74, %66 : vector<8x128xf32>
    %cst_17 = arith.constant 4.500000e-01 : f32
    %76 = vector.broadcast %cst_17 : f32 to vector<8x128xf32>
    %77 = arith.mulf %76, %67 : vector<8x128xf32>
    %78 = vector.broadcast %2 : f32 to vector<8x128xf32>
    %79 = arith.mulf %78, %62 : vector<8x128xf32>
    %80 = vector.broadcast %3 : f32 to vector<8x128xf32>
    %81 = arith.mulf %80, %63 : vector<8x128xf32>
    %82 = arith.addf %79, %81 : vector<8x128xf32>
    %83 = vector.broadcast %2 : f32 to vector<8x128xf32>
    %84 = arith.mulf %83, %63 : vector<8x128xf32>
    %85 = vector.broadcast %3 : f32 to vector<8x128xf32>
    %86 = arith.mulf %85, %62 : vector<8x128xf32>
    %87 = arith.subf %84, %86 : vector<8x128xf32>
    %88 = vector.broadcast %2 : f32 to vector<8x128xf32>
    %89 = arith.mulf %88, %64 : vector<8x128xf32>
    %90 = vector.broadcast %3 : f32 to vector<8x128xf32>
    %91 = arith.mulf %90, %65 : vector<8x128xf32>
    %92 = arith.subf %89, %91 : vector<8x128xf32>
    %93 = vector.broadcast %2 : f32 to vector<8x128xf32>
    %94 = arith.mulf %93, %65 : vector<8x128xf32>
    %95 = vector.broadcast %3 : f32 to vector<8x128xf32>
    %96 = arith.mulf %95, %64 : vector<8x128xf32>
    %97 = arith.addf %94, %96 : vector<8x128xf32>
    %98 = arith.addf %71, %75 : vector<8x128xf32>
    %99 = arith.addf %73, %77 : vector<8x128xf32>
    %100 = arith.subf %71, %75 : vector<8x128xf32>
    %101 = arith.subf %73, %77 : vector<8x128xf32>
    %102 = arith.addf %82, %92 : vector<8x128xf32>
    %103 = arith.addf %87, %97 : vector<8x128xf32>
    %104 = arith.subf %82, %92 : vector<8x128xf32>
    %105 = arith.subf %87, %97 : vector<8x128xf32>
    %106 = arith.addf %98, %105 : vector<8x128xf32>
    %107 = arith.subf %99, %104 : vector<8x128xf32>
    %108 = arith.addf %102, %101 : vector<8x128xf32>
    %109 = arith.subf %103, %100 : vector<8x128xf32>
    %110 = arith.subf %102, %101 : vector<8x128xf32>
    %111 = arith.addf %103, %100 : vector<8x128xf32>
    %112 = arith.subf %98, %105 : vector<8x128xf32>
    %113 = arith.addf %99, %104 : vector<8x128xf32>
    %cst_18 = arith.constant 4.500000e-01 : f32
    %114 = vector.broadcast %cst_18 : f32 to vector<8x128xf32>
    %115 = arith.mulf %114, %106 : vector<8x128xf32>
    %cst_19 = arith.constant 1.000000e-01 : f32
    %116 = vector.broadcast %cst_19 : f32 to vector<8x128xf32>
    %117 = arith.addf %115, %116 : vector<8x128xf32>
    %cst_20 = arith.constant 4.500000e-01 : f32
    %118 = vector.broadcast %cst_20 : f32 to vector<8x128xf32>
    %119 = arith.mulf %118, %107 : vector<8x128xf32>
    %cst_21 = arith.constant 4.500000e-01 : f32
    %120 = vector.broadcast %cst_21 : f32 to vector<8x128xf32>
    %121 = arith.mulf %120, %112 : vector<8x128xf32>
    %cst_22 = arith.constant 4.500000e-01 : f32
    %122 = vector.broadcast %cst_22 : f32 to vector<8x128xf32>
    %123 = arith.mulf %122, %113 : vector<8x128xf32>
    %124 = vector.broadcast %4 : f32 to vector<8x128xf32>
    %125 = arith.mulf %124, %108 : vector<8x128xf32>
    %126 = vector.broadcast %5 : f32 to vector<8x128xf32>
    %127 = arith.mulf %126, %109 : vector<8x128xf32>
    %128 = arith.addf %125, %127 : vector<8x128xf32>
    %129 = vector.broadcast %4 : f32 to vector<8x128xf32>
    %130 = arith.mulf %129, %109 : vector<8x128xf32>
    %131 = vector.broadcast %5 : f32 to vector<8x128xf32>
    %132 = arith.mulf %131, %108 : vector<8x128xf32>
    %133 = arith.subf %130, %132 : vector<8x128xf32>
    %134 = vector.broadcast %4 : f32 to vector<8x128xf32>
    %135 = arith.mulf %134, %110 : vector<8x128xf32>
    %136 = vector.broadcast %5 : f32 to vector<8x128xf32>
    %137 = arith.mulf %136, %111 : vector<8x128xf32>
    %138 = arith.subf %135, %137 : vector<8x128xf32>
    %139 = vector.broadcast %4 : f32 to vector<8x128xf32>
    %140 = arith.mulf %139, %111 : vector<8x128xf32>
    %141 = vector.broadcast %5 : f32 to vector<8x128xf32>
    %142 = arith.mulf %141, %110 : vector<8x128xf32>
    %143 = arith.addf %140, %142 : vector<8x128xf32>
    %c0_23 = arith.constant 0 : index
    %144 = arith.index_cast %7 : i32 to index
    %c0_24 = arith.constant 0 : index
    %145 = vector.load %arg3[%c0_23, %144, %c0_24] : memref<8x8x128xf32, #tpu.memory_space<vmem>>, vector<1x8x128xf32>
    %146 = vector.shape_cast %145 : vector<1x8x128xf32> to vector<8x128xf32>
    %147 = vector.shape_cast %117 : vector<8x128xf32> to vector<1x8x128xf32>
    tpu.vector_store %arg3[%c0_23, %144, %c0_24], %147 {strides = array<i32>} : memref<8x8x128xf32, #tpu.memory_space<vmem>>, vector<1x8x128xf32>,
    %c1_25 = arith.constant 1 : index
    %148 = arith.index_cast %7 : i32 to index
    %c0_26 = arith.constant 0 : index
    %149 = vector.load %arg3[%c1_25, %148, %c0_26] : memref<8x8x128xf32, #tpu.memory_space<vmem>>, vector<1x8x128xf32>
    %150 = vector.shape_cast %149 : vector<1x8x128xf32> to vector<8x128xf32>
    %151 = vector.shape_cast %119 : vector<8x128xf32> to vector<1x8x128xf32>
    tpu.vector_store %arg3[%c1_25, %148, %c0_26], %151 {strides = array<i32>} : memref<8x8x128xf32, #tpu.memory_space<vmem>>, vector<1x8x128xf32>,
    %c2_27 = arith.constant 2 : index
    %152 = arith.index_cast %7 : i32 to index
    %c0_28 = arith.constant 0 : index
    %153 = vector.load %arg3[%c2_27, %152, %c0_28] : memref<8x8x128xf32, #tpu.memory_space<vmem>>, vector<1x8x128xf32>
    %154 = vector.shape_cast %153 : vector<1x8x128xf32> to vector<8x128xf32>
    %155 = vector.shape_cast %128 : vector<8x128xf32> to vector<1x8x128xf32>
    tpu.vector_store %arg3[%c2_27, %152, %c0_28], %155 {strides = array<i32>} : memref<8x8x128xf32, #tpu.memory_space<vmem>>, vector<1x8x128xf32>,
    %c3_29 = arith.constant 3 : index
    %156 = arith.index_cast %7 : i32 to index
    %c0_30 = arith.constant 0 : index
    %157 = vector.load %arg3[%c3_29, %156, %c0_30] : memref<8x8x128xf32, #tpu.memory_space<vmem>>, vector<1x8x128xf32>
    %158 = vector.shape_cast %157 : vector<1x8x128xf32> to vector<8x128xf32>
    %159 = vector.shape_cast %133 : vector<8x128xf32> to vector<1x8x128xf32>
    tpu.vector_store %arg3[%c3_29, %156, %c0_30], %159 {strides = array<i32>} : memref<8x8x128xf32, #tpu.memory_space<vmem>>, vector<1x8x128xf32>,
    %c4_31 = arith.constant 4 : index
    %160 = arith.index_cast %7 : i32 to index
    %c0_32 = arith.constant 0 : index
    %161 = vector.load %arg3[%c4_31, %160, %c0_32] : memref<8x8x128xf32, #tpu.memory_space<vmem>>, vector<1x8x128xf32>
    %162 = vector.shape_cast %161 : vector<1x8x128xf32> to vector<8x128xf32>
    %163 = vector.shape_cast %138 : vector<8x128xf32> to vector<1x8x128xf32>
    tpu.vector_store %arg3[%c4_31, %160, %c0_32], %163 {strides = array<i32>} : memref<8x8x128xf32, #tpu.memory_space<vmem>>, vector<1x8x128xf32>,
    %c5_33 = arith.constant 5 : index
    %164 = arith.index_cast %7 : i32 to index
    %c0_34 = arith.constant 0 : index
    %165 = vector.load %arg3[%c5_33, %164, %c0_34] : memref<8x8x128xf32, #tpu.memory_space<vmem>>, vector<1x8x128xf32>
    %166 = vector.shape_cast %165 : vector<1x8x128xf32> to vector<8x128xf32>
    %167 = vector.shape_cast %143 : vector<8x128xf32> to vector<1x8x128xf32>
    tpu.vector_store %arg3[%c5_33, %164, %c0_34], %167 {strides = array<i32>} : memref<8x8x128xf32, #tpu.memory_space<vmem>>, vector<1x8x128xf32>,
    %c6_35 = arith.constant 6 : index
    %168 = arith.index_cast %7 : i32 to index
    %c0_36 = arith.constant 0 : index
    %169 = vector.load %arg3[%c6_35, %168, %c0_36] : memref<8x8x128xf32, #tpu.memory_space<vmem>>, vector<1x8x128xf32>
    %170 = vector.shape_cast %169 : vector<1x8x128xf32> to vector<8x128xf32>
    %171 = vector.shape_cast %121 : vector<8x128xf32> to vector<1x8x128xf32>
    tpu.vector_store %arg3[%c6_35, %168, %c0_36], %171 {strides = array<i32>} : memref<8x8x128xf32, #tpu.memory_space<vmem>>, vector<1x8x128xf32>,
    %c7_37 = arith.constant 7 : index
    %172 = arith.index_cast %7 : i32 to index
    %c0_38 = arith.constant 0 : index
    %173 = vector.load %arg3[%c7_37, %172, %c0_38] : memref<8x8x128xf32, #tpu.memory_space<vmem>>, vector<1x8x128xf32>
    %174 = vector.shape_cast %173 : vector<1x8x128xf32> to vector<8x128xf32>
    %175 = vector.shape_cast %123 : vector<8x128xf32> to vector<1x8x128xf32>
    tpu.vector_store %arg3[%c7_37, %172, %c0_38], %175 {strides = array<i32>} : memref<8x8x128xf32, #tpu.memory_space<vmem>>, vector<1x8x128xf32>,
    %c1_i32 = arith.constant 1 : i32
    return
  }
  func.func @transform_0(%arg0: i32, %arg1: memref<6xf32, #tpu.memory_space<smem>>) -> (i32, i32, i32) {
    %c0_i32 = arith.constant 0 : i32
    %c0_i32_0 = arith.constant 0 : i32
    %c0_i32_1 = arith.constant 0 : i32
    return %c0_i32, %arg0, %c0_i32_0 : i32, i32, i32
  }
  func.func @transform_1(%arg0: i32, %arg1: memref<6xf32, #tpu.memory_space<smem>>) -> (i32, i32, i32) {
    %c0_i32 = arith.constant 0 : i32
    %c0_i32_0 = arith.constant 0 : i32
    %c0_i32_1 = arith.constant 0 : i32
    return %c0_i32, %arg0, %c0_i32_0 : i32, i32, i32
  }
}

</mosaic_0001>

<llo_original>
// kernel: custom-call
$region0: #{custom-call}
  %s0 = inlined_call_operand.hbm [shape: c64[2,2,2], index: 0, kind: input, shape index: {}]
  %s1 = inlined_call_operand.vmem [shape: f32[2,2,2], index: 1, kind: output, shape index: {}]
  $region1: #{custom-call} parent=0
    #allocation0 [shape = 's32[1]{0}', space=sflag, size = 0x4, scoped, tag = 'scoped memory for custom-call']
    %2 = vsyncpa [#allocation0], 0
    %s3 = sshll.u32 %s1, 4
    %s4 = int_to_ptr.vmem [resolvable:$true] %s3
    %6 = dma.hbm_to_vmem [thread:$0]  %s0, 64, %s4, [#allocation0]
    %7 = dma.done [#allocation0], 64
    %8 = vsyncpa [#allocation0], 1

// kernel: custom-call.1
$region0: #{custom-call.1}
  %s0 = inlined_call_operand.hbm [shape: c64[2,2,2], index: 0, kind: input, shape index: {}]
  %s1 = inlined_call_operand.vmem [shape: f32[2,2,2], index: 1, kind: output, shape index: {}]
  %s2 = scalar_lea.hbm %s0, 64
  $region1: #{custom-call.1} parent=0
    #allocation0 [shape = 's32[1]{0}', space=sflag, size = 0x4, scoped, tag = 'scoped memory for custom-call.1']
    %3 = vsyncpa [#allocation0], 0
    %s4 = sshll.u32 %s1, 4
    %s5 = int_to_ptr.vmem [resolvable:$true] %s4
    %7 = dma.hbm_to_vmem [thread:$0]  %s2, 64, %s5, [#allocation0]
    %8 = dma.done [#allocation0], 64
    %9 = vsyncpa [#allocation0], 1

// kernel: custom-call.2
$region0: #{custom-call.2}
  %s0 = inlined_call_operand.vmem [shape: f32[2,2,2], index: 0, kind: input, shape index: {}]
  %s1 = inlined_call_operand.vmem [shape: f32[2,2,2], index: 1, kind: input, shape index: {}]
  %s2 = inlined_call_operand.hbm [shape: c64[2,2,2], index: 2, kind: output, shape index: {}]
  %s3 = scalar_lea.hbm %s2, 64
  $region1: #{custom-call.2} parent=0
    #allocation0 [shape = 's32[1]{0}', space=sflag, size = 0x4, scoped, tag = 'scoped memory for custom-call.2']
    %4 = vsyncpa [#allocation0], 0
    %s5 = sshll.u32 %s0, 4
    %s6 = int_to_ptr.vmem [resolvable:$true] %s5
    %8 = dma.vmem_to_hbm [thread:$0]  %s6, 64, %s2, [#allocation0]
    %9 = dma.done [#allocation0], 64
    %10 = vsyncpa [#allocation0], 1
  $region2: #{custom-call.2} parent=0
    #allocation1 [shape = 's32[1]{0}', space=sflag, size = 0x4, scoped, tag = 'scoped memory for custom-call.2']
    %11 = vsyncpa [#allocation1], 0
    %s12 = sshll.u32 %s1, 4
    %s13 = int_to_ptr.vmem [resolvable:$true] %s12
    %15 = dma.vmem_to_hbm [thread:$0]  %s13, 64, %s3, [#allocation1]
    %16 = dma.done [#allocation1], 64
    %17 = vsyncpa [#allocation1], 1

// kernel: general_one_qubit_gate_batched.1
$region0: #{general_one_qubit_gate_batched.1}
  #allocation0 [shape = 'u32[]', space=smem, size = 0x4, offset = 0x4, fixed_abs, tag = 'smem constant byte address 0x4 - core index']
  #allocation1 [shape = 'u32[144,128]{1,0:T(1,128)}', space=vmem, size = 0x12000, scoped, tag = 'internal scratch']
  #allocation2 [shape = 's32[1]{0}', space=sflag, size = 0x4, scoped, tag = 'scoped memory for general_one_qubit_gate_batched.1']
  #allocation3 [shape = 'u8[512]{0}', space=smem, size = 0x200, scoped, tag = 'prefetched SMEM operand 0']
  %s0 = inlined_call_operand.vmem [shape: f32[6], index: 0, kind: input, shape index: {}]
  %s1 = inlined_call_operand.vmem [shape: f32[8,8,128], index: 1, kind: input, shape index: {}]
  %s2 = inlined_call_operand.vmem [shape: f32[8,8,128], index: 2, kind: output, shape index: {}]
  %s3 = sld [smem:[#allocation0]]
  $region14: #{general_one_qubit_gate_batched.1} parent=0
    _
  %s5 = ssub.s32 1, %s3
  %s6 = scalar_select 0, %s5, %s3
  %s7 = sshll.u32 %s0, 4
  %s8 = int_to_ptr.vmem [resolvable:$true] %s7
  %10 = dma.vmem_to_smem %s8, 16, [#allocation3], [#allocation2]
  %11 = dma.done [#allocation2], 16
  %12 = sfence
  // Predicated region
  $region2: #{general_one_qubit_gate_batched.1} parent=0 // pred_check
    _
  $region3: #{general_one_qubit_gate_batched.1} parent=0 // pred_check_branch
    %14 = sbr.rel (0) target = $region5
  $region4: #{general_one_qubit_gate_batched.1} parent=0 // pred_region
    _
  $region5: #{general_one_qubit_gate_batched.1} parent=0 // pred_fallthru
    _
  %s15 = sld [smem:[#allocation3]]
  %s16 = sld [smem:[#allocation3 + $0x1]]
  %s17 = sld [smem:[#allocation3 + $0x2]]
  %s18 = sld [smem:[#allocation3 + $0x3]]
  %s19 = sld [smem:[#allocation3 + $0x4]]
  %s20 = sld [smem:[#allocation3 + $0x5]]
  %v21 = vld [vmem:[%s1] sm:$0xff]
  %s22 = sadd.s32 0, 8
  %s23 = scalar_lea.vmem %s1, %s22
  %v24 = vld [vmem:[%s23] sm:$0xff]
  %s25 = sadd.s32 0, 16
  %s26 = scalar_lea.vmem %s1, %s25
  %v27 = vld [vmem:[%s26] sm:$0xff]
  %s28 = sadd.s32 0, 24
  %s29 = scalar_lea.vmem %s1, %s28
  %v30 = vld [vmem:[%s29] sm:$0xff]
  %s31 = sadd.s32 0, 32
  %s32 = scalar_lea.vmem %s1, %s31
  %v33 = vld [vmem:[%s32] sm:$0xff]
  %s34 = sadd.s32 0, 40
  %s35 = scalar_lea.vmem %s1, %s34
  %v36 = vld [vmem:[%s35] sm:$0xff]
  %s37 = sadd.s32 0, 48
  %s38 = scalar_lea.vmem %s1, %s37
  %v39 = vld [vmem:[%s38] sm:$0xff]
  %s40 = sadd.s32 0, 56
  %s41 = scalar_lea.vmem %s1, %s40
  %v42 = vld [vmem:[%s41] sm:$0xff]
  %v43 = vstv %s15
  %v44 = vmul.f32 %v43, %v27
  %v45 = vstv %s16
  %v46 = vmul.f32 %v45, %v30
  %v47 = vadd.f32 %v44, %v46
  %v48 = vmul.f32 %v43, %v30
  %v49 = vmul.f32 %v45, %v27
  %v50 = vsub.f32 %v48, %v49
  %v51 = vmul.f32 %v43, %v33
  %v52 = vmul.f32 %v45, %v36
  %v53 = vsub.f32 %v51, %v52
  %v54 = vmul.f32 %v43, %v36
  %v55 = vmul.f32 %v45, %v33
  %v56 = vadd.f32 %v54, %v55
  %v57 = vadd.f32 %v21, %v39
  %v58 = vadd.f32 %v24, %v42
  %v59 = vsub.f32 %v21, %v39
  %v60 = vsub.f32 %v24, %v42
  %v61 = vadd.f32 %v47, %v53
  %v62 = vadd.f32 %v50, %v56
  %v63 = vsub.f32 %v47, %v53
  %v64 = vsub.f32 %v50, %v56
  %v65 = vsub.f32 %v57, %v64
  %v66 = vadd.f32 %v58, %v63
  %v67 = vsub.f32 %v61, %v60
  %v68 = vadd.f32 %v62, %v59
  %v69 = vadd.f32 %v61, %v60
  %v70 = vsub.f32 %v62, %v59
  %v71 = vadd.f32 %v57, %v64
  %v72 = vsub.f32 %v58, %v63
  %v73 = vmul.f32 %v65, 0.45
  %v74 = vadd.f32 %v73, 0.1
  %v75 = vmul.f32 %v66, 0.45
  %v76 = vmul.f32 %v71, 0.45
  %v77 = vmul.f32 %v72, 0.45
  %v78 = vstv %s17
  %v79 = vmul.f32 %v78, %v67
  %v80 = vstv %s18
  %v81 = vmul.f32 %v80, %v68
  %v82 = vadd.f32 %v79, %v81
  %v83 = vmul.f32 %v78, %v68
  %v84 = vmul.f32 %v80, %v67
  %v85 = vsub.f32 %v83, %v84
  %v86 = vmul.f32 %v78, %v69
  %v87 = vmul.f32 %v80, %v70
  %v88 = vsub.f32 %v86, %v87
  %v89 = vmul.f32 %v78, %v70
  %v90 = vmul.f32 %v80, %v69
  %v91 = vadd.f32 %v89, %v90
  %v92 = vadd.f32 %v74, %v76
  %v93 = vadd.f32 %v75, %v77
  %v94 = vsub.f32 %v74, %v76
  %v95 = vsub.f32 %v75, %v77
  %v96 = vadd.f32 %v82, %v88
  %v97 = vadd.f32 %v85, %v91
  %v98 = vsub.f32 %v82, %v88
  %v99 = vsub.f32 %v85, %v91
  %v100 = vadd.f32 %v92, %v99
  %v101 = vsub.f32 %v93, %v98
  %v102 = vadd.f32 %v96, %v95
  %v103 = vsub.f32 %v97, %v94
  %v104 = vsub.f32 %v96, %v95
  %v105 = vadd.f32 %v97, %v94
  %v106 = vsub.f32 %v92, %v99
  %v107 = vadd.f32 %v93, %v98
  %v108 = vmul.f32 %v100, 0.45
  %v109 = vadd.f32 %v108, 0.1
  %v110 = vmul.f32 %v101, 0.45
  %v111 = vmul.f32 %v106, 0.45
  %v112 = vmul.f32 %v107, 0.45
  %v113 = vstv %s19
  %v114 = vmul.f32 %v113, %v102
  %v115 = vstv %s20
  %v116 = vmul.f32 %v115, %v103
  %v117 = vadd.f32 %v114, %v116
  %v118 = vmul.f32 %v113, %v103
  %v119 = vmul.f32 %v115, %v102
  %v120 = vsub.f32 %v118, %v119
  %v121 = vmul.f32 %v113, %v104
  %v122 = vmul.f32 %v115, %v105
  %v123 = vsub.f32 %v121, %v122
  %v124 = vmul.f32 %v113, %v105
  %v125 = vmul.f32 %v115, %v104
  %v126 = vadd.f32 %v124, %v125
  %127 = vst [vmem:[%s2] sm:$0xff] %v109
  %s128 = scalar_lea.vmem %s2, %s22
  %129 = vst [vmem:[%s128] sm:$0xff] %v110
  %s130 = scalar_lea.vmem %s2, %s25
  %131 = vst [vmem:[%s130] sm:$0xff] %v117
  %s132 = scalar_lea.vmem %s2, %s28
  %133 = vst [vmem:[%s132] sm:$0xff] %v120
  %s134 = scalar_lea.vmem %s2, %s31
  %135 = vst [vmem:[%s134] sm:$0xff] %v123
  %s136 = scalar_lea.vmem %s2, %s34
  %137 = vst [vmem:[%s136] sm:$0xff] %v126
  %s138 = scalar_lea.vmem %s2, %s37
  %139 = vst [vmem:[%s138] sm:$0xff] %v111
  %s140 = scalar_lea.vmem %s2, %s40
  %141 = vst [vmem:[%s140] sm:$0xff] %v112
  // Predicated region
  $region6: #{general_one_qubit_gate_batched.1} parent=0 // pred_check
    _
  $region7: #{general_one_qubit_gate_batched.1} parent=0 // pred_check_branch
    %143 = sbr.rel (0) target = $region9
  $region8: #{general_one_qubit_gate_batched.1} parent=0 // pred_region
    _
  $region9: #{general_one_qubit_gate_batched.1} parent=0 // pred_fallthru
    _
  // Predicated region
  $region10: #{general_one_qubit_gate_batched.1} parent=0 // pred_check
    _
  $region11: #{general_one_qubit_gate_batched.1} parent=0 // pred_check_branch
    %145 = sbr.rel (0) target = $region13
  $region12: #{general_one_qubit_gate_batched.1} parent=0 // pred_region
    _
  $region13: #{general_one_qubit_gate_batched.1} parent=0 // pred_fallthru
    _

</llo_original>
